<compile_context>
chip_gen: v6e
topology: v6e:2x2x1
jax: 0.10.0
libtpu: 0.0.40
codegen_flags: <defaults>
</compile_context>

<pallas_src>
import functools

import jax
import jax.numpy as jnp
from jax.experimental import pallas as pl
from jax.experimental.pallas import tpu as pltpu


DEFAULT_TM = 1024
DEFAULT_TN = 1024
DEFAULT_TK = 512


def _round_up(x, m):
    return ((x + m - 1) // m) * m


def _cdiv(a, b):
    return (a + b - 1) // b


def _sublane_multiple(dtype):
    # 8 for f32, 16 for bf16, 32 for 8-bit dtypes (sublane packing of a vreg).
    return 32 // jnp.dtype(dtype).itemsize


def _vmem_limit_bytes():
    """~75% of physical VMEM: ~96 MiB on v5e/v6e (128 MiB), ~48 MiB on v7x (64 MiB)."""
    try:
        cap = getattr(pltpu.get_tpu_info(), "vmem_capacity_bytes", None)
        if cap:
            return int(cap) * 3 // 4
    except Exception:
        pass
    return 48 * 1024 * 1024  # safe for v7x's 64 MiB VMEM


def _linear_single_k_kernel(x_ref, w_ref, b_ref, o_ref, *, activation):
    """in_dim fits in one K block: no accumulator scratch, direct store."""
    x = x_ref[...].astype(w_ref.dtype)  # VPU cast, hidden under the MXU
    out = jnp.dot(x, w_ref[...], preferred_element_type=jnp.float32) + b_ref[...]
    if activation == "relu":
        out = jnp.maximum(out, 0.0)
    o_ref[...] = out.astype(o_ref.dtype)


def _linear_multi_k_kernel(x_ref, w_ref, b_ref, o_ref, acc_ref, *, activation):
    """K reduction over the last grid axis with an f32 VMEM accumulator."""
    k = pl.program_id(2)
    nk = pl.num_programs(2)

    x = x_ref[...].astype(w_ref.dtype)
    psum = jnp.dot(x, w_ref[...], preferred_element_type=jnp.float32)

    @pl.when(k == 0)
    def _():
        acc_ref[...] = psum  # first step: no zero-init + re-store

    @pl.when(jnp.logical_and(k > 0, k < nk - 1))
    def _():
        acc_ref[...] += psum

    @pl.when(k == nk - 1)
    def _():
        out = acc_ref[...] + psum + b_ref[...]  # skip the final acc store
        if activation == "relu":
            out = jnp.maximum(out, 0.0)
        o_ref[...] = out.astype(o_ref.dtype)


def prepare_lin_regressor_params(
    weight, bias, *, compute_dtype=jnp.bfloat16, tn=DEFAULT_TN, tk=DEFAULT_TK
):
    """One-time parameter prep (do this at init, outside the hot path).

    weight: [out_dim, in_dim] (PyTorch nn.Linear layout);  bias: [out_dim].
    Returns the transposed (and, on the multi-K path, K-zero-padded) weight in
    compute_dtype, the lane-padded f32 bias, and effective tile sizes.
    """
    out_dim, in_dim = weight.shape

    # N is padded to a lane-aligned width once (weights only) -> unmasked vst stores.
    n_pad = _round_up(out_dim, 128)
    tn_eff = min(_round_up(tn, 128), n_pad)
    n_pad = _round_up(out_dim, tn_eff)

    if in_dim <= tk:
        # Single-K fast path: K block spans the full in_dim, so neither W^T nor x
        # needs any K padding (block dim == full array dim is always legal).
        tk_eff = in_dim
        k_pad = in_dim
    else:
        tk_eff = _round_up(tk, 128)
        k_pad = _round_up(in_dim, tk_eff)

    w_t = jnp.zeros((k_pad, n_pad), compute_dtype)
    w_t = w_t.at[:in_dim, :out_dim].set(weight.T.astype(compute_dtype))
    b_p = jnp.zeros((1, n_pad), jnp.float32)
    b_p = b_p.at[0, :out_dim].set(bias.astype(jnp.float32))

    return dict(
        w_t=w_t,
        bias=b_p,
        in_dim=in_dim,
        out_dim=out_dim,
        tk=tk_eff,
        tn=tn_eff,
        compute_dtype=jnp.dtype(compute_dtype),
    )


def lin_regressor_forward(x, params, *, tm=DEFAULT_TM, activation="identity"):
    """LinRegressor forward (config=None): x [B, in_dim] -> [B, out_dim]."""
    if activation not in ("identity", "relu", "softmax"):
        raise NotImplementedError("Unsupported activation function")

    B, in_dim = x.shape
    assert in_dim == params["in_dim"]
    w_t, b = params["w_t"], params["bias"]
    k_pad, n_pad = w_t.shape
    tk, tn = params["tk"], params["tn"]
    out_dim = params["out_dim"]

    # K is only zero-padded on the multi-K path when in_dim % tk != 0.
    # (Zeros keep the reduction axis inert; never leave garbage along K.)
    if k_pad != in_dim:
        x = jnp.pad(x, ((0, 0), (0, k_pad - in_dim)))

    # M is never padded: a partial last block uses masked output stores.
    sub_m = _sublane_multiple(params["compute_dtype"])
    tm_eff = max(sub_m, min(_round_up(tm, sub_m), _round_up(B, sub_m)))
    grid_n = n_pad // tn
    if grid_n == 1 and B >= 512 and B <= tm_eff:
        # Single M and N tile: split M so both v7x TensorCores get work.
        tm_eff = _round_up(_cdiv(B, 2), max(sub_m, 256))
    grid_m = _cdiv(B, tm_eff)
    grid_k = k_pad // tk
    multi_k = grid_k > 1

    # Only relu is fused in-kernel; softmax is applied (unfused) below.
    kernel_act = activation if activation == "relu" else "identity"

    cost = pl.CostEstimate(
        flops=2 * B * n_pad * k_pad,
        transcendentals=0,
        bytes_accessed=(
            x.size * x.dtype.itemsize
            + w_t.size * w_t.dtype.itemsize
            + b.size * b.dtype.itemsize
            + B * n_pad * x.dtype.itemsize
        ),
    )

    if multi_k:
        grid = (grid_m, grid_n, grid_k)
        in_specs = [
            pl.BlockSpec((tm_eff, tk), lambda i, j, k: (i, k)),  # x tile
            pl.BlockSpec((tk, tn), lambda i, j, k: (k, j)),      # W^T tile
            pl.BlockSpec((1, tn), lambda i, j, k: (0, j)),       # bias tile
        ]
        out_specs = pl.BlockSpec((tm_eff, tn), lambda i, j, k: (i, j))
        scratch_shapes = [pltpu.VMEM((tm_eff, tn), jnp.float32)]
        kernel = functools.partial(_linear_multi_k_kernel, activation=kernel_act)
        dims = ("parallel", "parallel", "arbitrary")
    else:
        grid = (grid_m, grid_n)
        in_specs = [
            pl.BlockSpec((tm_eff, tk), lambda i, j: (i, 0)),
            pl.BlockSpec((tk, tn), lambda i, j: (0, j)),
            pl.BlockSpec((1, tn), lambda i, j: (0, j)),
        ]
        out_specs = pl.BlockSpec((tm_eff, tn), lambda i, j: (i, j))
        scratch_shapes = []
        kernel = functools.partial(_linear_single_k_kernel, activation=kernel_act)
        dims = ("parallel", "parallel")

    out = pl.pallas_call(
        kernel,
        out_shape=jax.ShapeDtypeStruct((B, n_pad), x.dtype),
        grid_spec=pltpu.PrefetchScalarGridSpec(
            num_scalar_prefetch=0,
            grid=grid,
            in_specs=in_specs,
            out_specs=out_specs,
            scratch_shapes=scratch_shapes,
        ),
        compiler_params=pltpu.CompilerParams(
            dimension_semantics=dims,
            vmem_limit_bytes=_vmem_limit_bytes(),
        ),
        cost_estimate=cost,
    )(x, w_t, b)

    if n_pad != out_dim:
        out = out[:, :out_dim]
    if activation == "softmax":
        # TODO(synk): softmax needs a cross-N-tile normalization; applied unfused
        # in the wrapper rather than inside the kernel.
        out = jax.nn.softmax(out, axis=-1)
    return out


def init_linear_params(key, in_dim, out_dim):
    """Deterministic init matching nn.Linear's uniform(-1/sqrt(in), 1/sqrt(in))."""
    kw, kb = jax.random.split(key)
    bound = 1.0 / jnp.sqrt(jnp.float32(in_dim))
    weight = jax.random.uniform(kw, (out_dim, in_dim), jnp.float32, -bound, bound)
    bias = jax.random.uniform(kb, (out_dim,), jnp.float32, -bound, bound)
    return weight, bias


if __name__ == "__main__":
    key = jax.random.PRNGKey(0)
    k_x, k_p, k_x2, k_p2 = jax.random.split(key, 4)

    # --- test 1: module's nominal small shape, default bf16 compute, single-K path ---
    batch, input_dim, output_dim = 2, 32, 8
    x = jax.random.normal(k_x, (batch, input_dim), jnp.float32)
    weight, bias = init_linear_params(k_p, input_dim, output_dim)
    params_bf16 = prepare_lin_regressor_params(weight, bias)  # bf16 default

    out1 = jax.block_until_ready(lin_regressor_forward(x, params_bf16))
    ref1 = x @ weight.T + bias
    assert out1.shape == (batch, output_dim)
    assert jnp.allclose(out1, ref1, atol=3e-2, rtol=3e-2)

    # --- test 2: f32 opt-in compute, unaligned dims, single-K path, no padding slices ---
    b2, d_in2, d_out2 = 50, 300, 200
    x2 = jax.random.normal(k_x2, (b2, d_in2), jnp.float32)
    w2, bi2 = init_linear_params(k_p2, d_in2, d_out2)
    p2_f32 = prepare_lin_regressor_params(w2, bi2, compute_dtype=jnp.float32)
    out2 = jax.block_until_ready(lin_regressor_forward(x2, p2_f32))
    ref2 = x2 @ w2.T + bi2
    assert out2.shape == (b2, d_out2)
    assert jnp.allclose(out2, ref2, atol=1e-3, rtol=1e-3)

    # --- test 3: bf16 multi-K tiled path (M/N/K grid, partial M block, K zero-pad) ---
    p3 = prepare_lin_regressor_params(w2, bi2, compute_dtype=jnp.bfloat16, tn=128, tk=128)
    out3 = jax.block_until_ready(lin_regressor_forward(x2, p3, tm=16))
    assert out3.shape == (b2, d_out2)
    assert jnp.allclose(out3, ref2, atol=3e-2, rtol=3e-2)

    # --- test 4: fused relu output activation ---
    out4 = jax.block_until_ready(lin_regressor_forward(x, params_bf16, activation="relu"))
    ref4 = jnp.maximum(ref1, 0.0)
    assert jnp.allclose(out4, ref4, atol=3e-2, rtol=3e-2)

    # --- test 5: softmax output activation (wrapper-applied, unfused) ---
    out5 = jax.block_until_ready(lin_regressor_forward(x, params_bf16, activation="softmax"))
    ref5 = jax.nn.softmax(ref1, axis=-1)
    assert jnp.allclose(out5, ref5, atol=3e-2, rtol=3e-2)

    print("KERNEL_OK")
</pallas_src>

<mosaic_0001>
module attributes {stable_mosaic.version = 11 : i64} {
  func.func @_linear_single_k_kernel(%arg0: i32, %arg1: i32, %arg2: memref<16x32xf32, #tpu.memory_space<vmem>>, %arg3: memref<32x128xbf16, #tpu.memory_space<vmem>>, %arg4: memref<1x128xf32, #tpu.memory_space<vmem>>, %arg5: memref<16x128xf32, #tpu.memory_space<vmem>>) attributes {dimension_semantics = [#tpu.dimension_semantics<parallel>, #tpu.dimension_semantics<parallel>], iteration_bounds = array<i64: 1, 1>, scalar_prefetch = 0 : i64, scratch_operands = 0 : i64, tpu.core_type = #tpu.core_type<tc>, window_params = [{transform_indices = @transform_0, window_bounds = array<i64: 16, 32>}, {transform_indices = @transform_1, window_bounds = array<i64: 32, 128>}, {transform_indices = @transform_2, window_bounds = array<i64: 1, 128>}, {transform_indices = @transform_3, window_bounds = array<i64: 16, 128>}]} {
    %c0 = arith.constant 0 : index
    %c0_0 = arith.constant 0 : index
    %0 = vector.load %arg2[%c0, %c0_0] : memref<16x32xf32, #tpu.memory_space<vmem>>, vector<16x32xf32>
    %1 = arith.truncf %0 : vector<16x32xf32> to vector<16x32xbf16>
    %c0_1 = arith.constant 0 : index
    %c0_2 = arith.constant 0 : index
    %2 = vector.load %arg3[%c0_1, %c0_2] : memref<32x128xbf16, #tpu.memory_space<vmem>>, vector<32x128xbf16>
    %cst = arith.constant dense<0.000000e+00> : vector<16x128xf32>
    %3 = tpu.matmul %1, %2, %cst {dimension_numbers = #tpu.dot_dimension_numbers<[1], [0], [0], [1], [0, 0, 1, 1], [], []>} : vector<16x32xbf16>, vector<32x128xbf16>, vector<16x128xf32> -> vector<16x128xf32>
    %c0_3 = arith.constant 0 : index
    %c0_4 = arith.constant 0 : index
    %4 = vector.load %arg4[%c0_3, %c0_4] : memref<1x128xf32, #tpu.memory_space<vmem>>, vector<1x128xf32>
    %5 = vector.broadcast %4 : vector<1x128xf32> to vector<16x128xf32>
    %6 = arith.addf %3, %5 : vector<16x128xf32>
    %c0_5 = arith.constant 0 : index
    %c0_6 = arith.constant 0 : index
    %7 = vector.load %arg5[%c0_5, %c0_6] : memref<16x128xf32, #tpu.memory_space<vmem>>, vector<16x128xf32>
    tpu.vector_store %arg5[%c0_5, %c0_6], %6 {strides = array<i32>} : memref<16x128xf32, #tpu.memory_space<vmem>>, vector<16x128xf32>,
    return
  }
  func.func @transform_0(%arg0: i32, %arg1: i32) -> (i32, i32) {
    %c0_i32 = arith.constant 0 : i32
    %c0_i32_0 = arith.constant 0 : i32
    return %arg0, %c0_i32 : i32, i32
  }
  func.func @transform_1(%arg0: i32, %arg1: i32) -> (i32, i32) {
    %c0_i32 = arith.constant 0 : i32
    %c0_i32_0 = arith.constant 0 : i32
    return %c0_i32, %arg1 : i32, i32
  }
  func.func @transform_2(%arg0: i32, %arg1: i32) -> (i32, i32) {
    %c0_i32 = arith.constant 0 : i32
    %c0_i32_0 = arith.constant 0 : i32
    return %c0_i32, %arg1 : i32, i32
  }
  func.func @transform_3(%arg0: i32, %arg1: i32) -> (i32, i32) {
    %c0_i32 = arith.constant 0 : i32
    return %arg0, %arg1 : i32, i32
  }
}

</mosaic_0001>

<llo_original>
// kernel: tpu_custom_call.1
$region0: #{tpu_custom_call.1}
  #allocation0 [shape = 'u32[]', space=smem, size = 0x4, offset = 0x4, fixed_abs, tag = 'smem constant byte address 0x4 - core index']
  #allocation1 [shape = 'u32[144,128]{1,0:T(1,128)}', space=vmem, size = 0x12000, scoped, tag = 'internal scratch']
  %s0 = inlined_call_operand.hbm [shape: f32[2,32], index: 0, kind: input, shape index: {}]
  %s1 = inlined_call_operand.hbm [shape: bf16[32,128], index: 1, kind: input, shape index: {}]
  %s2 = inlined_call_operand.vmem [shape: f32[1,128], index: 2, kind: input, shape index: {}]
  %s3 = inlined_call_operand.hbm [shape: f32[2,128], index: 3, kind: output, shape index: {}]
  %s4 = sld [smem:[#allocation0]]
  $region30: #{tpu_custom_call.1} parent=0
    _
  %s6 = ssub.s32 1, %s4
  %s7 = scalar_select 0, %s6, %s4
  $region1: #{tpu_custom_call.1} parent=0
    #allocation2 [shape = 'u8[8192]{0}', space=vmem, size = 0x2000, scoped, tag = 'input window, operand 0, single buffered']
    #allocation3 [shape = 's32[1]{0}', space=sflag, size = 0x4, scoped, tag = 'scoped memory for tpu_custom_call.1']
    #allocation4 [shape = 's32[1]{0}', space=sflag, size = 0x4, scoped, tag = 'scoped memory for tpu_custom_call.1']
    #allocation5 [shape = 'u8[8192]{0}', space=vmem, size = 0x2000, scoped, tag = 'input window, operand 1, single buffered']
    #allocation6 [shape = 's32[1]{0}', space=sflag, size = 0x4, scoped, tag = 'scoped memory for tpu_custom_call.1']
    #allocation7 [shape = 'u8[8192]{0}', space=vmem, size = 0x2000, scoped, tag = 'output window, operand 0, single buffered']
    %8 = vsyncpa [#allocation3], 0
    %9 = vsyncpa [#allocation6], 0
    %10 = vsyncpa [#allocation4], 0
    // Predicated region
    $region2: #{tpu_custom_call.1} parent=1 // pred_check
      _
    $region3: #{tpu_custom_call.1} parent=1 // pred_check_branch
      %12 = sbr.rel (0) target = $region5
    $region4: #{tpu_custom_call.1} parent=1 // pred_region
      %s14 = ssub.s32 256, 32
      %15 = vsyncadd [#allocation3], %s14
      %s16 = sshll.u32 [#allocation2], 4
      %s17 = int_to_ptr.vmem [resolvable:$true] %s16
      %22 = dma.hbm_to_vmem [thread:$0]  %s0, 32, %s17, [#allocation3], 32, 32, 2
    $region5: #{tpu_custom_call.1} parent=1 // pred_fallthru
      _
    // Predicated region
    $region6: #{tpu_custom_call.1} parent=1 // pred_check
      _
    $region7: #{tpu_custom_call.1} parent=1 // pred_check_branch
      %24 = sbr.rel (0) target = $region9
    $region8: #{tpu_custom_call.1} parent=1 // pred_region
      %s26 = ssub.s32 256, 256
      %27 = vsyncadd [#allocation6], %s26
      %s28 = sshll.u32 [#allocation5], 4
      %s29 = int_to_ptr.vmem [resolvable:$true] %s28
      %34 = dma.hbm_to_vmem [thread:$0]  %s1, 256, %s29, [#allocation6], 64, 64, 4
    $region9: #{tpu_custom_call.1} parent=1 // pred_fallthru
      _
    // Predicated region
    $region10: #{tpu_custom_call.1} parent=1 // pred_check
      _
    $region11: #{tpu_custom_call.1} parent=1 // pred_check_branch
      %36 = sbr.rel (0) target = $region13
    $region12: #{tpu_custom_call.1} parent=1 // pred_region
      _
    $region13: #{tpu_custom_call.1} parent=1 // pred_fallthru
      _
    // Predicated region
    $region14: #{tpu_custom_call.1} parent=1 // pred_check
      _
    $region15: #{tpu_custom_call.1} parent=1 // pred_check_branch
      %38 = sbr.rel (0) target = $region17
    $region16: #{tpu_custom_call.1} parent=1 // pred_region
      %39 = dma.done [#allocation3], 256
    $region17: #{tpu_custom_call.1} parent=1 // pred_fallthru
      _
    // Predicated region
    $region18: #{tpu_custom_call.1} parent=1 // pred_check
      _
    $region19: #{tpu_custom_call.1} parent=1 // pred_check_branch
      %41 = sbr.rel (0) target = $region21
    $region20: #{tpu_custom_call.1} parent=1 // pred_region
      %42 = dma.done [#allocation6], 256
    $region21: #{tpu_custom_call.1} parent=1 // pred_fallthru
      _
    %v44 = vld [vmem:[#allocation2] sm:$0xff]
    %v45 = vld [vmem:[#allocation2 + $0x8] sm:$0xff]
    %v46 = vpack.c.bf16 %v45, %v44
    %v47 = vld [vmem:[#allocation5] sm:$0xf]
    %v48 = vld [vmem:[#allocation5 + $0x4] sm:$0xf]
    %v49 = vld [vmem:[#allocation5 + $0x8] sm:$0xf]
    %v50 = vld [vmem:[#allocation5 + $0xc] sm:$0xf]
    %v51 = vld [vmem:[%s2] sm:$0x1]
    %v53 = vlaneseq
    %v54 = vshrl.u32 %v53, 7
    %v55 = vsub.s32 0, %v54
    %v56 = vrot.slane %v51, %v55
    %v62 = vunpack.c.l.b16 %v47
    %v63 = vunpack.c.l.b16 %v48
    %v64 = vunpack.c.l.b16 %v49
    %v65 = vunpack.c.l.b16 %v50
    %v66 = vpack.c.b16 %v63, %v62
    %v67 = vpack.c.b16 %v65, %v64
    %vm70 = vcmask 261120
    %v72 = vsel %vm70, %v46, 0
    %74 = vmatprep.subr.bf16.mxu0 0
    %75 = vmatpush1.bf16.msra.mxu0 0
    %76 = vmatprep.subr.bf16.mxu0 0
    %77 = vmatpush1.bf16.msra.mxu0 0
    %78 = vmatprep.subr.bf16.mxu0 0
    %79 = vmatpush1.bf16.msra.mxu0 0
    %80 = vmatprep.subr.bf16.mxu0 0
    %81 = vmatpush1.bf16.msra.mxu0 0
    %82 = vmatprep.subr.bf16.mxu0 0
    %83 = vmatpush1.bf16.msra.mxu0 0
    %84 = vmatprep.subr.bf16.mxu0 0
    %85 = vmatpush1.bf16.msra.mxu0 0
    %86 = vmatprep.subr.bf16.mxu0 0
    %87 = vmatpush1.bf16.msra.mxu0 %v67
    %88 = vmatprep.subr.bf16.mxu0 0
    %89 = vmatpush1.bf16.msra.mxu0 %v66
    %90 = vmatprep.subr.bf16.mxu0 0
    %91 = vmatpush2.bf16.msra.mxu0 0
    %92 = vmatprep.subr.bf16.mxu0 0
    %93 = vmatpush2.bf16.msra.mxu0 0
    %94 = vmatprep.subr.bf16.mxu0 0
    %95 = vmatpush2.bf16.msra.mxu0 0
    %96 = vmatprep.subr.bf16.mxu0 0
    %97 = vmatpush2.bf16.msra.mxu0 0
    %98 = vmatprep.subr.bf16.mxu0 0
    %99 = vmatpush2.bf16.msra.mxu0 0
    %100 = vmatprep.subr.bf16.mxu0 0
    %101 = vmatpush2.bf16.msra.mxu0 0
    %102 = vmatprep.subr.bf16.mxu0 0
    %103 = vmatpush2.bf16.msra.mxu0 0
    %104 = vmatprep.subr.bf16.mxu0 0
    %105 = vmatpush2.bf16.msra.mxu0 0
    %106 = vmatprep.mubr.bf16.mxu0 0
    %107 = vmatmul.mubr.bf16.gmra.mxu0 %v72
    %v108 = vpop.f32.mrf.mxu0
    %v109 = vadd.f32 %v56, %v108
    %v110 = vpop.f32.mrf.mxu0
    %v111 = vpop.f32.mrf.mxu0
    %v112 = vadd.f32 %v56, %v111
    %v113 = vpop.f32.mrf.mxu0
    %114 = vdwg.mxu0
    %115 = vst [vmem:[#allocation7] sm:$0xff] %v109
    %116 = vst [vmem:[#allocation7 + $0x8] sm:$0xff] %v112
    // Predicated region
    $region22: #{tpu_custom_call.1} parent=1 // pred_check
      _
    $region23: #{tpu_custom_call.1} parent=1 // pred_check_branch
      %118 = sbr.rel (0) target = $region25
    $region24: #{tpu_custom_call.1} parent=1 // pred_region
      %s120 = ssub.s32 256, 32
      %121 = vsyncadd [#allocation4], %s120
      %s122 = sshll.u32 [#allocation7], 4
      %s123 = int_to_ptr.vmem [resolvable:$true] %s122
      %128 = dma.vmem_to_hbm [thread:$0]  %s123, 32, %s3, [#allocation4], 32, 32, 2
    $region25: #{tpu_custom_call.1} parent=1 // pred_fallthru
      _
    // Predicated region
    $region26: #{tpu_custom_call.1} parent=1 // pred_check
      _
    $region27: #{tpu_custom_call.1} parent=1 // pred_check_branch
      %130 = sbr.rel (0) target = $region29
    $region28: #{tpu_custom_call.1} parent=1 // pred_region
      %131 = dma.done [#allocation4], 256
    $region29: #{tpu_custom_call.1} parent=1 // pred_fallthru
      _
    %132 = vsyncpa [#allocation3], 1
    %133 = vsyncpa [#allocation6], 1
    %134 = vsyncpa [#allocation4], 1

</llo_original>
